<compile_context>
chip_gen: v7x
topology: tpu7x:2x2x1
jax: 0.10.0
libtpu: 0.0.40
codegen_flags: <defaults>
</compile_context>

<pallas_src>
import functools

import jax
import jax.numpy as jnp
from jax import lax
from jax.experimental import pallas as pl
from jax.experimental.pallas import tpu as pltpu

_LANE = 128


def _round_up(x, m):
    return ((x + m - 1) // m) * m


def _vmem_capacity_bytes():
    """Per-core VMEM capacity; conservative (v7x) fallback if the query fails."""
    try:
        cap = int(pltpu.get_tpu_info().vmem_capacity_bytes)
        if cap > 0:
            return cap
    except Exception:
        pass
    return 64 << 20


def _pick_chunk(c, t_pad128):
    """Lane width of the f32 accumulators / per-iteration f32 temporaries."""
    chunk = _LANE
    for cand in (512, 384, 256):
        if cand <= t_pad128 and c * cand * 4 <= (1 << 20):
            chunk = cand
            break
    return min(chunk, t_pad128)


def _pick_time_tile(t_pad, c, chunk, itemsize, target_bytes):
    """Largest multiple of `chunk` dividing t_pad with c*tT*itemsize <= target."""
    max_tt = max(chunk, (target_bytes // max(1, c * itemsize)) // chunk * chunk)
    best = chunk
    cand = chunk
    limit = min(max_tt, t_pad)
    while cand <= limit:
        if t_pad % cand == 0:
            best = cand
        cand += chunk
    return best


def _pick_batch_block(b, c, tT, chunk, itemsize, target_bytes):
    """Pack batch elements per grid step, but keep the parallel axis >= 2."""
    for cand in (8, 4, 2):
        if b % cand != 0:
            continue
        if b // cand < 2:                       # keep megacore / 2-TC sharding alive
            continue
        if cand * c * tT * itemsize > target_bytes:
            continue
        if cand * c * chunk * 8 > (8 << 20):    # bound the f32 accumulator scratch
            continue
        return cand
    return 1


def _stats_pooling_kernel(x_ref, o_ref, sum_ref, sumsq_ref, *,
                          t_total, chunk, n_chunks):
    # x_ref:     (bB, C, tT)     input tile (native dtype)
    # o_ref:     (bB, 2, C)      output tile (row 0 = mean, row 1 = std)
    # sum_ref:   (bB, C, chunk)  f32 lane-wide running sum        (persists over k)
    # sumsq_ref: (bB, C, chunk)  f32 lane-wide running sum of sq  (persists over k)
    k = pl.program_id(1)

    @pl.when(k == 0)
    def _():
        sum_ref[...] = jnp.zeros_like(sum_ref)
        sumsq_ref[...] = jnp.zeros_like(sumsq_ref)

    if n_chunks == 1:
        xc = x_ref[...].astype(jnp.float32)                 # (bB, C, chunk)
        sum_ref[...] += xc
        sumsq_ref[...] += xc * xc
    else:
        def body(i, carry):
            start = pl.multiple_of(i * chunk, chunk)
            xc = x_ref[:, :, pl.ds(start, chunk)].astype(jnp.float32)
            sum_ref[...] += xc
            sumsq_ref[...] += xc * xc
            return carry

        lax.fori_loop(0, n_chunks, body, 0, unroll=(n_chunks <= 8))

    @pl.when(k == pl.num_programs(1) - 1)
    def _():
        inv_t = jnp.float32(1.0 / t_total)
        s = jnp.sum(sum_ref[...], axis=-1)                  # (bB, C)  XLU reduce, once
        ss = jnp.sum(sumsq_ref[...], axis=-1)               # (bB, C)
        mean = s * inv_t
        var = jnp.maximum(ss * inv_t - mean * mean, 0.0)
        std = jnp.sqrt(var + 1e-5)
        o_ref[...] = jnp.concatenate(
            [mean[:, None, :], std[:, None, :]], axis=1).astype(o_ref.dtype)


def stats_pooling(x, *, block_bytes_target=None):
    """x: (B, C, T) -> (B, 2*C) = [mean over T ++ sqrt(biased var over T + 1e-5)]."""
    B, C, T = x.shape
    itemsize = jnp.dtype(x.dtype).itemsize

    vmem_cap = _vmem_capacity_bytes()
    if block_bytes_target is None:
        # ~8 MiB blocks on 64-MiB-VMEM chips (v7x), ~16 MiB on 128-MiB chips (v5e/v6e).
        block_bytes_target = (16 << 20) if vmem_cap > (64 << 20) else (8 << 20)

    t_pad128 = _round_up(T, _LANE)
    chunk = _pick_chunk(C, t_pad128)
    t_pad = _round_up(T, chunk)
    tT = _pick_time_tile(t_pad, C, chunk, itemsize, block_bytes_target)
    bB = _pick_batch_block(B, C, tT, chunk, itemsize, block_bytes_target)

    if t_pad != T:
        # Zero padding is exact for sum / sum-of-squares; we divide by the real T.
        x = jnp.pad(x, ((0, 0), (0, 0), (0, t_pad - T)))

    grid = (B // bB, t_pad // tT)
    n_chunks = tT // chunk

    # VMEM budget: double-buffered input block + f32 accumulators + f32 chunk temps.
    block_bytes = bB * C * tT * itemsize
    acc_bytes = 2 * bB * C * chunk * 4
    temp_bytes = 2 * bB * C * chunk * 4
    vmem_limit = 2 * block_bytes + acc_bytes + temp_bytes + (6 << 20)
    vmem_limit = max(vmem_limit, 16 << 20)
    vmem_limit = min(vmem_limit, (vmem_cap * 3) // 4)

    cost = pl.CostEstimate(
        flops=3 * B * C * t_pad,                 # cast/square/adds
        transcendentals=B * C,                   # sqrt per output channel
        bytes_accessed=B * C * t_pad * itemsize + B * 2 * C * itemsize,
    )

    kernel = functools.partial(
        _stats_pooling_kernel, t_total=T, chunk=chunk, n_chunks=n_chunks)

    out = pl.pallas_call(
        kernel,
        out_shape=jax.ShapeDtypeStruct((B, 2, C), x.dtype),
        grid_spec=pltpu.PrefetchScalarGridSpec(
            num_scalar_prefetch=0,
            grid=grid,
            in_specs=[pl.BlockSpec((bB, C, tT), lambda b, k: (b, 0, k))],
            out_specs=pl.BlockSpec((bB, 2, C), lambda b, k: (b, 0, 0)),
            scratch_shapes=[
                pltpu.VMEM((bB, C, chunk), jnp.float32),   # lane-wide running sum
                pltpu.VMEM((bB, C, chunk), jnp.float32),   # lane-wide running sum of sq
            ],
        ),
        compiler_params=pltpu.CompilerParams(
            dimension_semantics=("parallel", "arbitrary"),
            vmem_limit_bytes=int(vmem_limit),
        ),
        cost_estimate=cost,
    )(x)

    # (B, 2, C) -> (B, 2C): first C entries mean, next C std (matches torch.cat).
    return out.reshape(B, 2 * C)


def stats_pooling_ref(x):
    mean = jnp.mean(x, axis=-1, keepdims=True)
    std = jnp.sqrt(jnp.mean((x - mean) ** 2, axis=-1) + 1e-5)
    return jnp.concatenate([jnp.squeeze(mean, -1), std], axis=-1)


if __name__ == "__main__":
    key = jax.random.PRNGKey(0)

    # 1) Small shape matching the module spec (exercises T padding, single k step).
    B, C, T = 2, 4, 16
    x = jax.random.normal(key, (B, C, T), dtype=jnp.float32)
    out = jax.block_until_ready(stats_pooling(x))
    ref = stats_pooling_ref(x)
    assert out.shape == (B, 2 * C)
    assert jnp.allclose(out, ref, atol=1e-5, rtol=1e-4)

    # 2) Longer T: exercises the chunked (fori_loop) accumulation path.
    x2 = jax.random.normal(jax.random.PRNGKey(1), (2, 4, 2048), dtype=jnp.float32)
    out2 = jax.block_until_ready(stats_pooling(x2))
    assert jnp.allclose(out2, stats_pooling_ref(x2), atol=1e-5, rtol=1e-4)

    # 3) Tiny block target: exercises the multi-step T grid (accumulate across k).
    out3 = jax.block_until_ready(stats_pooling(x2, block_bytes_target=8192))
    assert jnp.allclose(out3, stats_pooling_ref(x2), atol=1e-5, rtol=1e-4)

    print("KERNEL_OK")
</pallas_src>

<mosaic_0001>
module attributes {stable_mosaic.version = 11 : i64} {
  func.func @_stats_pooling_kernel(%arg0: i32, %arg1: i32, %arg2: memref<1x4x128xf32, #tpu.memory_space<vmem>>, %arg3: memref<1x2x4xf32, #tpu.memory_space<vmem>>, %arg4: memref<1x4x128xf32, #tpu.memory_space<vmem>>, %arg5: memref<1x4x128xf32, #tpu.memory_space<vmem>>) attributes {dimension_semantics = [#tpu.dimension_semantics<parallel>, #tpu.dimension_semantics<arbitrary>], iteration_bounds = array<i64: 2, 1>, scalar_prefetch = 0 : i64, scratch_operands = 2 : i64, tpu.core_type = #tpu.core_type<tc>, window_params = [{transform_indices = @transform_0, window_bounds = array<i64: 1, 4, 128>}, {transform_indices = @transform_1, window_bounds = array<i64: 1, 2, 4>}]} {
    %c0_i32 = arith.constant 0 : i32
    %0 = arith.cmpi eq, %arg1, %c0_i32 : i32
    %1 = arith.extui %0 : i1 to i32
    %c0_i32_0 = arith.constant 0 : i32
    %2 = arith.cmpi ne, %1, %c0_i32_0 : i32
    scf.if %2 {
      %cst = arith.constant 0.000000e+00 : f32
      %14 = vector.broadcast %cst : f32 to vector<1x4x128xf32>
      %c0_17 = arith.constant 0 : index
      %c0_18 = arith.constant 0 : index
      %c0_19 = arith.constant 0 : index
      %15 = vector.load %arg4[%c0_17, %c0_18, %c0_19] : memref<1x4x128xf32, #tpu.memory_space<vmem>>, vector<1x4x128xf32>
      tpu.vector_store %arg4[%c0_17, %c0_18, %c0_19], %14 {strides = array<i32>} : memref<1x4x128xf32, #tpu.memory_space<vmem>>, vector<1x4x128xf32>,
      %cst_20 = arith.constant 0.000000e+00 : f32
      %16 = vector.broadcast %cst_20 : f32 to vector<1x4x128xf32>
      %c0_21 = arith.constant 0 : index
      %c0_22 = arith.constant 0 : index
      %c0_23 = arith.constant 0 : index
      %17 = vector.load %arg5[%c0_21, %c0_22, %c0_23] : memref<1x4x128xf32, #tpu.memory_space<vmem>>, vector<1x4x128xf32>
      tpu.vector_store %arg5[%c0_21, %c0_22, %c0_23], %16 {strides = array<i32>} : memref<1x4x128xf32, #tpu.memory_space<vmem>>, vector<1x4x128xf32>,
    } else {
    }
    %c0 = arith.constant 0 : index
    %c0_1 = arith.constant 0 : index
    %c0_2 = arith.constant 0 : index
    %3 = vector.load %arg2[%c0, %c0_1, %c0_2] : memref<1x4x128xf32, #tpu.memory_space<vmem>>, vector<1x4x128xf32>
    %c0_3 = arith.constant 0 : index
    %c0_4 = arith.constant 0 : index
    %c0_5 = arith.constant 0 : index
    %4 = vector.load %arg4[%c0_3, %c0_4, %c0_5] : memref<1x4x128xf32, #tpu.memory_space<vmem>>, vector<1x4x128xf32>
    %5 = arith.addf %4, %3 : vector<1x4x128xf32>
    %c0_6 = arith.constant 0 : index
    %c0_7 = arith.constant 0 : index
    %c0_8 = arith.constant 0 : index
    %6 = vector.load %arg4[%c0_6, %c0_7, %c0_8] : memref<1x4x128xf32, #tpu.memory_space<vmem>>, vector<1x4x128xf32>
    tpu.vector_store %arg4[%c0_6, %c0_7, %c0_8], %5 {strides = array<i32>} : memref<1x4x128xf32, #tpu.memory_space<vmem>>, vector<1x4x128xf32>,
    %c0_9 = arith.constant 0 : index
    %c0_10 = arith.constant 0 : index
    %c0_11 = arith.constant 0 : index
    %7 = vector.load %arg5[%c0_9, %c0_10, %c0_11] : memref<1x4x128xf32, #tpu.memory_space<vmem>>, vector<1x4x128xf32>
    %8 = arith.mulf %3, %3 : vector<1x4x128xf32>
    %9 = arith.addf %7, %8 : vector<1x4x128xf32>
    %c0_12 = arith.constant 0 : index
    %c0_13 = arith.constant 0 : index
    %c0_14 = arith.constant 0 : index
    %10 = vector.load %arg5[%c0_12, %c0_13, %c0_14] : memref<1x4x128xf32, #tpu.memory_space<vmem>>, vector<1x4x128xf32>
    tpu.vector_store %arg5[%c0_12, %c0_13, %c0_14], %9 {strides = array<i32>} : memref<1x4x128xf32, #tpu.memory_space<vmem>>, vector<1x4x128xf32>,
    %c0_i32_15 = arith.constant 0 : i32
    %11 = arith.cmpi eq, %arg1, %c0_i32_15 : i32
    %12 = arith.extui %11 : i1 to i32
    %c0_i32_16 = arith.constant 0 : i32
    %13 = arith.cmpi ne, %12, %c0_i32_16 : i32
    scf.if %13 {
      %c0_17 = arith.constant 0 : index
      %c0_18 = arith.constant 0 : index
      %c0_19 = arith.constant 0 : index
      %14 = vector.load %arg4[%c0_17, %c0_18, %c0_19] : memref<1x4x128xf32, #tpu.memory_space<vmem>>, vector<1x4x128xf32>
      %cst = arith.constant dense<0.000000e+00> : vector<1x4xf32>
      %15 = vector.multi_reduction <add>, %14, %cst [2] : vector<1x4x128xf32> to vector<1x4xf32>
      %c0_20 = arith.constant 0 : index
      %c0_21 = arith.constant 0 : index
      %c0_22 = arith.constant 0 : index
      %16 = vector.load %arg5[%c0_20, %c0_21, %c0_22] : memref<1x4x128xf32, #tpu.memory_space<vmem>>, vector<1x4x128xf32>
      %cst_23 = arith.constant dense<0.000000e+00> : vector<1x4xf32>
      %17 = vector.multi_reduction <add>, %16, %cst_23 [2] : vector<1x4x128xf32> to vector<1x4xf32>
      %cst_24 = arith.constant 6.250000e-02 : f32
      %18 = vector.broadcast %cst_24 : f32 to vector<1x4xf32>
      %19 = arith.mulf %15, %18 : vector<1x4xf32>
      %cst_25 = arith.constant 6.250000e-02 : f32
      %20 = vector.broadcast %cst_25 : f32 to vector<1x4xf32>
      %21 = arith.mulf %17, %20 : vector<1x4xf32>
      %22 = arith.mulf %19, %19 : vector<1x4xf32>
      %23 = arith.subf %21, %22 : vector<1x4xf32>
      %cst_26 = arith.constant 0.000000e+00 : f32
      %24 = vector.broadcast %cst_26 : f32 to vector<1x4xf32>
      %25 = arith.maximumf %23, %24 : vector<1x4xf32>
      %cst_27 = arith.constant 9.99999974E-6 : f32
      %26 = vector.broadcast %cst_27 : f32 to vector<1x4xf32>
      %27 = arith.addf %25, %26 : vector<1x4xf32>
      %28 = math.sqrt %27 : vector<1x4xf32>
      %29 = vector.shape_cast %19 : vector<1x4xf32> to vector<1x1x4xf32>
      %30 = vector.shape_cast %28 : vector<1x4xf32> to vector<1x1x4xf32>
      %31 = tpu.concatenate %29, %30 in 1 : vector<1x1x4xf32>, vector<1x1x4xf32> -> vector<1x2x4xf32>
      %c0_28 = arith.constant 0 : index
      %c0_29 = arith.constant 0 : index
      %c0_30 = arith.constant 0 : index
      %32 = vector.load %arg3[%c0_28, %c0_29, %c0_30] : memref<1x2x4xf32, #tpu.memory_space<vmem>>, vector<1x2x4xf32>
      tpu.vector_store %arg3[%c0_28, %c0_29, %c0_30], %31 {strides = array<i32>} : memref<1x2x4xf32, #tpu.memory_space<vmem>>, vector<1x2x4xf32>,
    } else {
    }
    return
  }
  func.func @transform_0(%arg0: i32, %arg1: i32) -> (i32, i32, i32) {
    %c0_i32 = arith.constant 0 : i32
    %c0_i32_0 = arith.constant 0 : i32
    return %arg0, %c0_i32, %arg1 : i32, i32, i32
  }
  func.func @transform_1(%arg0: i32, %arg1: i32) -> (i32, i32, i32) {
    %c0_i32 = arith.constant 0 : i32
    %c0_i32_0 = arith.constant 0 : i32
    %c0_i32_1 = arith.constant 0 : i32
    return %arg0, %c0_i32, %c0_i32_0 : i32, i32, i32
  }
}

</mosaic_0001>

<llo_original>
// kernel: tpu_custom_call.1
$region0: #{tpu_custom_call.1}
  #allocation0 [shape = 'u32[]', space=smem, size = 0x4, offset = 0x4, fixed_abs, tag = 'smem constant byte address 0x4 - core index']
  #allocation1 [shape = 'u32[144,128]{1,0:T(1,128)}', space=vmem, size = 0x12000, scoped, tag = 'internal scratch']
  #allocation2 [shape = 'f32[1,4,128]{2,1,0:T(4,128)}', space=vmem, size = 0x800, scoped, tag = 'scratch operand']
  #allocation3 [shape = 'f32[1,4,128]{2,1,0:T(4,128)}', space=vmem, size = 0x800, scoped, tag = 'scratch operand']
  %s0 = inlined_call_operand.hbm [shape: f32[2,4,128], index: 0, kind: input, shape index: {}]
  %s1 = inlined_call_operand.hbm [shape: f32[2,2,4], index: 1, kind: output, shape index: {}]
  %s2 = sld [smem:[#allocation0]]
  $region49: #{tpu_custom_call.1} parent=0
    _
  %s4 = ssub.s32 1, %s2
  %s5 = scalar_select 0, %s4, %s2
  $region1: #{tpu_custom_call.1} parent=0
    #allocation4 [shape = 'u8[4096]{0}', space=vmem, size = 0x1000, scoped, tag = 'input window, operand 0']
    #allocation5 [shape = 's32[2]{0}', space=sflag, size = 0x8, scoped, tag = 'scoped memory for tpu_custom_call.1']
    #allocation6 [shape = 's32[2]{0}', space=sflag, size = 0x8, scoped, tag = 'scoped memory for tpu_custom_call.1']
    #allocation7 [shape = 'u8[2048]{0}', space=vmem, size = 0x800, scoped, tag = 'output window, operand 0']
    %6 = vsyncpa [#allocation5], 0
    %s7 = scalar_lea.sflag [#allocation5], 1
    %8 = vsyncpa %s7, 0
    %9 = vsyncpa [#allocation6], 0
    %s10 = scalar_lea.sflag [#allocation6], 1
    %11 = vsyncpa %s10, 0
    loop: start=0, step=1, limit=4
    $region2: #{tpu_custom_call.1} parent=1 // loop_pre_header
      _
    $region3: #{tpu_custom_call.1} parent=1 // loop_header
      %s13 = sphi 0, %s17
      %p14 = scmp.ge.s32.totalorder %s13, 4
      %s20 = sphi 0, %s32
      %s21 = sphi 0, %s28
      %s22 = sphi 0, %s20
      %s23 = sphi 0, %s21
      %s24 = sphi 0, %s22
      %s25 = sphi 0, %s23
      %s37 = sphi 0, %s39
      %s40 = sphi 0, %s37
      %s41 = sphi 0, %s40
      %s57 = sphi 0, %s41
      %s63 = sphi 0, %s65
      %s66 = sphi 0, %s63
      %s67 = sphi 0, %s66
      %s83 = sphi 0, %s67
    $region4: #{tpu_custom_call.1} parent=1 // loop_header_branch
      %16 = sbr.rel (%p14) target = $region8
    $region5: #{tpu_custom_call.1} parent=1 // loop_body
      %s18 = ssub.s32 %s13, 1
      %s19 = ssub.s32 %s13, 2
      %s26 = sadd.s32 1, %s21
      %p27 = scmp.ge.s32.totalorder %s26, 1
      %s28 = scalar_select %p27, 0, %s26
      %s29 = sadd.s32 1, %s20
      %s30 = scalar_select %p27, %s29, %s20
      %p31 = scmp.ge.s32.totalorder %s30, 2
      %s32 = scalar_select %p31, 0, %s30
      %s33 = ssub.s32 %s20, %s32
      %s34 = ssub.s32 %s21, %s28
      %s35 = sor.u32 %s33, %s34
      %p36 = scmp.eq.s32.totalorder %s35, 0
      %s38 = sadd.s32 %s37, 1
      %s39 = scalar_select %p36, %s37, %s38
      %p42 = pneg %p36
      %p43 = scmp.eq.s32.totalorder %s13, 1
      %p44 = por %p42, %p43
      %p45 = scmp.ne.s32.totalorder %s37, %s40
      %p46 = scmp.eq.s32.totalorder %s13, 0
      %p47 = por %p45, %p46
      %p48 = scmp.ne.s32.totalorder %s37, %s40
      %p49 = scmp.eq.s32.totalorder %s18, 1
      %p50 = por %p48, %p49
      %p51 = scmp.ne.s32.totalorder %s40, %s41
      %p52 = scmp.eq.s32.totalorder %s18, 0
      %p53 = por %p51, %p52
      %p54 = scmp.ne.s32.totalorder %s40, %s41
      %p55 = scmp.eq.s32.totalorder %s19, 1
      %p56 = por %p54, %p55
      %p58 = scmp.ne.s32.totalorder %s41, %s57
      %p59 = scmp.eq.s32.totalorder %s19, 0
      %p60 = por %p58, %p59
      %s61 = ssub.s32 %s20, %s32
      %p62 = scmp.eq.s32.totalorder %s61, 0
      %s64 = sadd.s32 %s63, 1
      %s65 = scalar_select %p62, %s63, %s64
      %p68 = pneg %p62
      %p69 = scmp.eq.s32.totalorder %s13, 1
      %p70 = por %p68, %p69
      %p71 = scmp.ne.s32.totalorder %s63, %s66
      %p72 = scmp.eq.s32.totalorder %s13, 0
      %p73 = por %p71, %p72
      %p74 = scmp.ne.s32.totalorder %s63, %s66
      %p75 = scmp.eq.s32.totalorder %s18, 1
      %p76 = por %p74, %p75
      %p77 = scmp.ne.s32.totalorder %s66, %s67
      %p78 = scmp.eq.s32.totalorder %s18, 0
      %p79 = por %p77, %p78
      %p80 = scmp.ne.s32.totalorder %s66, %s67
      %p81 = scmp.eq.s32.totalorder %s19, 1
      %p82 = por %p80, %p81
      %p84 = scmp.ne.s32.totalorder %s67, %s83
      %p85 = scmp.eq.s32.totalorder %s19, 0
      %p86 = por %p84, %p85
      %p87 = scmp.le.s32.totalorder 1, %s13
      %p88 = scmp.lt.s32.totalorder %s13, 3
      %p89 = pnand %p87, %p88
      %p90 = pneg %p89
      // Predicated region
      $region9: #{tpu_custom_call.1} parent=5 // pred_check
        _
      $region10: #{tpu_custom_call.1} parent=5 // pred_check_branch
        %92 = sbr.rel (%p89) target = $region12
      $region11: #{tpu_custom_call.1} parent=5 // pred_region
        %s93 = ssub.s32 %s13, 1
      $region12: #{tpu_custom_call.1} parent=5 // pred_fallthru
        _
      %p94 = scmp.lt.s32.totalorder %s13, 2
      // Predicated region
      $region13: #{tpu_custom_call.1} parent=5 // pred_check
        %p95 = pneg %p94
      $region14: #{tpu_custom_call.1} parent=5 // pred_check_branch
        %97 = sbr.rel (%p95) target = $region16
      $region15: #{tpu_custom_call.1} parent=5 // pred_region
        // Predicated region
        $region17: #{tpu_custom_call.1} parent=15 // pred_check
          %p98 = pneg %p47
        $region18: #{tpu_custom_call.1} parent=15 // pred_check_branch
          %100 = sbr.rel (%p98) target = $region20
        $region19: #{tpu_custom_call.1} parent=15 // pred_region
          %s101 = sand.u32 %s37, 1
          %s102 = scalar_lea.sflag [#allocation5], %s101
          %s103 = sand.u32 %s37, 1
          %s104 = smul.addr %s103, 4
          %s105 = scalar_lea.vmem [#allocation4], %s104
          %s107 = ssub.s32 64, 64
          %108 = vsyncadd %s102, %s107
          %s109 = sadd.s32 %s21, %s20
          %s110 = smul.addr %s109, 64
          %s111 = scalar_lea.hbm %s0, %s110
          %s113 = sshll.u32 %s105, 4
          %s114 = int_to_ptr.vmem [resolvable:$true] %s113
          %116 = dma.hbm_to_vmem [thread:$0]  %s111, 64, %s114, %s102
        $region20: #{tpu_custom_call.1} parent=15 // pred_fallthru
          _
      $region16: #{tpu_custom_call.1} parent=5 // pred_fallthru
        _
      %p117 = scmp.le.s32.totalorder 1, %s13
      %p118 = scmp.lt.s32.totalorder %s13, 3
      %p119 = pnand %p117, %p118
      %p120 = pneg %p119
      // Predicated region
      $region21: #{tpu_custom_call.1} parent=5 // pred_check
        _
      $region22: #{tpu_custom_call.1} parent=5 // pred_check_branch
        %122 = sbr.rel (%p119) target = $region24
      $region23: #{tpu_custom_call.1} parent=5 // pred_region
        %s123 = ssub.s32 %s13, 1
        %s124 = sand.u32 %s40, 1
        %s125 = scalar_lea.sflag [#allocation5], %s124
        %s126 = sand.u32 %s40, 1
        %s127 = smul.addr %s126, 4
        %s128 = scalar_lea.vmem [#allocation4], %s127
        // Predicated region
        $region25: #{tpu_custom_call.1} parent=23 // pred_check
          %p129 = pneg %p53
        $region26: #{tpu_custom_call.1} parent=23 // pred_check_branch
          %131 = sbr.rel (%p129) target = $region28
        $region27: #{tpu_custom_call.1} parent=23 // pred_region
          %132 = dma.done %s125, 64
        $region28: #{tpu_custom_call.1} parent=23 // pred_fallthru
          _
        %s133 = sand.u32 %s40, 1
        %s134 = scalar_lea.sflag [#allocation5], %s133
        %s135 = sand.u32 %s40, 1
        %s136 = smul.addr %s135, 4
        %s137 = scalar_lea.vmem [#allocation4], %s136
        %p138 = pneg %p53
        %p139 = pneg %p50
        %p140 = pneg %p79
        %p141 = pneg %p76
        %s142 = sand.u32 %s66, 1
        %s143 = scalar_lea.sflag [#allocation6], %s142
        %s144 = sand.u32 %s66, 1
        %s145 = smul.addr %s144, 2
        %s146 = scalar_lea.vmem [#allocation7], %s145
        %p147 = scmp.eq.s32.totalorder %s23, 0
        // Predicated region
        $region29: #{tpu_custom_call.1} parent=23 // pred_check
          %p148 = pneg %p147
        $region30: #{tpu_custom_call.1} parent=23 // pred_check_branch
          %150 = sbr.rel (%p148) target = $region32
        $region31: #{tpu_custom_call.1} parent=23 // pred_region
          %151 = vst [vmem:[#allocation2] sm:$0xf] 0.0
          %152 = vst [vmem:[#allocation3] sm:$0xf] 0.0
        $region32: #{tpu_custom_call.1} parent=23 // pred_fallthru
          _
        %v153 = vld [vmem:[%s128] sm:$0xf]
        %v154 = vld [vmem:[#allocation2] sm:$0xf]
        %v155 = vadd.f32 %v154, %v153
        %156 = vst [vmem:[#allocation2] sm:$0xf] %v155
        %v157 = vld [vmem:[#allocation3] sm:$0xf]
        %v158 = vmul.f32 %v153, %v153
        %v159 = vadd.f32 %v157, %v158
        %160 = vst [vmem:[#allocation3] sm:$0xf] %v159
        // Predicated region
        $region33: #{tpu_custom_call.1} parent=23 // pred_check
          %p161 = pneg %p147
        $region34: #{tpu_custom_call.1} parent=23 // pred_check_branch
          %163 = sbr.rel (%p161) target = $region36
        $region35: #{tpu_custom_call.1} parent=23 // pred_region
          %v164 = vld [vmem:[#allocation2] sm:$0xf]
          %vm165 = vcmask 1043456
          %v166 = vsel %vm165, %v164, 0.0
          %167 = vadd.xlane.f32.xlu0 %v166
          %v168 = vpop.xlane.xlu0 %167
          %v169 = vld [vmem:[#allocation3] sm:$0xf]
          %v170 = vsel %vm165, %v169, 0.0
          %171 = vadd.xlane.f32.xlu0 %v170
          %v172 = vpop.xlane.xlu0 %171
          %v173 = vmul.f32 %v168, 0.0625
          %v174 = vmul.f32 %v172, 0.0625
          %v175 = vmul.f32 %v173, %v173
          %v176 = vsub.f32 %v174, %v175
          %v177 = vmax.f32 %v176, 0.0
          %v178 = vadd.f32 %v177, 1e-05
          %v179 = vrsqrt.pop %v178
          %v180 = vmul.f32 %v178, %v179
          %vm181 = vcmp.eq.f32.partialorder %v178, inf
          %v182 = vsel %vm181, %v178, %v180
          %vm183 = vcmp.eq.f32.partialorder %v178, 0.0
          %v184 = vand.u32 %v178, 2147483648
          %v185 = vsel %vm183, %v184, %v182
          %v187 = vlaneseq
          %v188 = vand.u32 %v187, 127
          %v189 = vlaneseq
          %v190 = vshrl.u32 %v189, 7
          %v191 = vsub.s32 %v188, %v190
          %v192 = vrot.slane %v173, %v191
          %v195 = vlaneseq
          %v196 = vshrl.u32 %v195, 7
          %v197 = vsub.s32 %v188, %v196
          %v198 = vrot.slane %v185, %v197
          %vm200 = vcmask 1040384
          %v201 = vsel %vm200, %v192, %v198
          %vm202 = vcmask 25600
          %203 = vst.msk [vmem:[%s146] sm:$0x3] %vm202, %v201
        $region36: #{tpu_custom_call.1} parent=23 // pred_fallthru
          _
        %s204 = sand.u32 %s66, 1
        %s205 = scalar_lea.sflag [#allocation6], %s204
        %s206 = sand.u32 %s66, 1
        %s207 = smul.addr %s206, 2
        %s208 = scalar_lea.vmem [#allocation7], %s207
        // Predicated region
        $region37: #{tpu_custom_call.1} parent=23 // pred_check
          %p209 = pneg %p76
        $region38: #{tpu_custom_call.1} parent=23 // pred_check_branch
          %211 = sbr.rel (%p209) target = $region40
        $region39: #{tpu_custom_call.1} parent=23 // pred_region
          %s213 = ssub.s32 32, 32
          %214 = vsyncadd %s205, %s213
          %s215 = smul.addr %s22, 32
          %s216 = scalar_lea.hbm %s1, %s215
          %s218 = sshll.u32 %s208, 4
          %s219 = int_to_ptr.vmem [resolvable:$true] %s218
          %221 = dma.vmem_to_hbm [thread:$0]  %s219, 32, %s216, %s205
        $region40: #{tpu_custom_call.1} parent=23 // pred_fallthru
          _
      $region24: #{tpu_custom_call.1} parent=5 // pred_fallthru
        _
      %p222 = scmp.le.s32.totalorder 2, %s13
      // Predicated region
      $region41: #{tpu_custom_call.1} parent=5 // pred_check
        %p223 = pneg %p222
      $region42: #{tpu_custom_call.1} parent=5 // pred_check_branch
        %225 = sbr.rel (%p223) target = $region44
      $region43: #{tpu_custom_call.1} parent=5 // pred_region
        %s226 = ssub.s32 %s13, 2
        // Predicated region
        $region45: #{tpu_custom_call.1} parent=43 // pred_check
          %p227 = pneg %p82
        $region46: #{tpu_custom_call.1} parent=43 // pred_check_branch
          %229 = sbr.rel (%p227) target = $region48
        $region47: #{tpu_custom_call.1} parent=43 // pred_region
          %s230 = sand.u32 %s67, 1
          %s231 = scalar_lea.sflag [#allocation6], %s230
          %s232 = sand.u32 %s67, 1
          %s233 = smul.addr %s232, 2
          %s234 = scalar_lea.vmem [#allocation7], %s233
          %235 = dma.done %s231, 32
        $region48: #{tpu_custom_call.1} parent=43 // pred_fallthru
          _
      $region44: #{tpu_custom_call.1} parent=5 // pred_fallthru
        _
    $region6: #{tpu_custom_call.1} parent=1 // loop_footer
      %s17 = sadd.s32 1, %s13
    $region7: #{tpu_custom_call.1} parent=1 // loop_footer_branch
      %12 = sbr.rel target = $region3
    $region8: #{tpu_custom_call.1} parent=1 // loop_exit
      _
    %236 = vsyncpa [#allocation5], 1
    %s237 = scalar_lea.sflag [#allocation5], 1
    %238 = vsyncpa %s237, 1
    %239 = vsyncpa [#allocation6], 1
    %s240 = scalar_lea.sflag [#allocation6], 1
    %241 = vsyncpa %s240, 1

</llo_original>
